<compile_context>
chip_gen: v5e
topology: v5e:2x2
jax: 0.10.0
libtpu: 0.0.40
codegen_flags: <defaults>
</compile_context>

<pallas_src>
from functools import partial

import numpy as np
import jax
import jax.numpy as jnp
from jax.experimental import pallas as pl
from jax.experimental.pallas import tpu as pltpu


# ----------------------------------------------------------------------------
# Fused Pallas kernel
# ----------------------------------------------------------------------------
def make_fused_kernel(*, inv_student_temp, center_momentum, loss_scale,
                      inv_bvg, warmup_teacher_temp, teacher_temp,
                      inv_warmup_steps, has_local):
    """Builds the fused DINO loss kernel.

    Static (baked-in) scalars (recompile if B/Vg/Vl or the temps change):
      inv_student_temp    : 1 / student_temp
      center_momentum     : EMA momentum for the center
      loss_scale          : 1 / (B * n_loss_terms)
      inv_bvg             : 1 / (B * num_global_views)
      warmup_teacher_temp : start of linear teacher-temp warmup
      teacher_temp        : final (constant) teacher temperature
      inv_warmup_steps    : 1 / warmup_teacher_temp_steps
    """

    def body(step_ref, t_ref, sg_ref, sl_ref, c_ref, loss_ref, center_ref):
        # ---- teacher temperature: linear warmup -> constant (scalar unit) ---
        step_f = step_ref[0].astype(jnp.float32)
        frac = jnp.minimum(step_f * inv_warmup_steps, 1.0)
        t_temp = warmup_teacher_temp + (teacher_temp - warmup_teacher_temp) * frac
        inv_t_temp = 1.0 / t_temp

        t = t_ref[...].astype(jnp.float32)              # (Vg, B, D)
        c = c_ref[...].astype(jnp.float32)              # (1, D)
        Vg, B, D = t.shape
        c3 = c.reshape(1, 1, D)

        # ---- teacher: softmax((t - center) * inv_t_temp) over D -------------
        lt = (t - c3) * inv_t_temp
        lt = lt - jnp.max(lt, axis=-1, keepdims=True)
        et = jnp.exp(lt)
        q = et * pl.reciprocal(jnp.sum(et, axis=-1, keepdims=True),
                               approx=False)            # (Vg, B, D), exact

        # ---- student: -log_softmax(s * inv_student_temp) over D -------------
        def neg_log_softmax(s_ref):
            ls = s_ref[...].astype(jnp.float32) * inv_student_temp
            sh = ls - jnp.max(ls, axis=-1, keepdims=True)
            lse = jnp.log(jnp.sum(jnp.exp(sh), axis=-1, keepdims=True))
            return lse - sh                              # (V, B, D)

        nl_g = neg_log_softmax(sg_ref)                   # (Vg, B, D)

        # ---- factorized masked pairwise cross-entropy sum --------------------
        # sum_{iq != v} <q_iq, nl_g_v>  +  sum_{iq, v} <q_iq, nl_l_v>
        q_sum = jnp.sum(q, axis=0)                       # (B, D)
        acc = q_sum * jnp.sum(nl_g, axis=0)              # all global/global
        acc = acc - jnp.sum(q * nl_g, axis=0)            # drop same-index pairs
        if sl_ref is not None:
            nl_l = neg_log_softmax(sl_ref)               # (Vl, B, D)
            acc = acc + q_sum * jnp.sum(nl_l, axis=0)    # local/global pairs

        loss_ref[0] = jnp.sum(acc) * loss_scale          # scalar -> SMEM

        # ---- EMA center update (teacher already resident in VMEM) ------------
        batch_center = jnp.sum(jnp.sum(t, axis=0), axis=0,
                               keepdims=True) * inv_bvg  # (1, D)
        center_ref[...] = (c * center_momentum
                           + batch_center * (1.0 - center_momentum)
                           ).astype(center_ref.dtype)

    if has_local:
        def kernel(step_ref, t_ref, sg_ref, sl_ref, c_ref, loss_ref, cen_ref):
            body(step_ref, t_ref, sg_ref, sl_ref, c_ref, loss_ref, cen_ref)
    else:
        def kernel(step_ref, t_ref, sg_ref, c_ref, loss_ref, cen_ref):
            body(step_ref, t_ref, sg_ref, None, c_ref, loss_ref, cen_ref)
    return kernel


# ----------------------------------------------------------------------------
# Module forward (thin JAX glue around a single pallas_call)
# ----------------------------------------------------------------------------
def dino_distillation_loss(student_global, teacher_global, student_local,
                           center, step, *,
                           student_temp, warmup_teacher_temp, teacher_temp,
                           warmup_teacher_temp_steps, center_momentum):
    """Functional equivalent of DinoDistillationLoss.forward.

    `center` is carried as a (1, D) float32 buffer; `step` as a (1,) int32
    buffer.  Returns (total_loss, new_center, new_step)."""
    B, Vg, D = teacher_global.shape
    has_local = student_local is not None
    Vl = student_local.shape[1] if has_local else 0
    n_terms = Vg * (Vg - 1) + Vg * Vl
    if n_terms == 0:
        raise ValueError(
            "DinoDistillationLoss: n_loss_terms == 0 "
            "(need num_global_views > 1 or local views)")

    # Repack so the kernel sees (sublane, lane) = (B, D) per view slab.
    t_vbd = jnp.transpose(teacher_global, (1, 0, 2))     # (Vg, B, D)
    sg_vbd = jnp.transpose(student_global, (1, 0, 2))    # (Vg, B, D)

    kernel = make_fused_kernel(
        inv_student_temp=float(1.0 / student_temp),
        center_momentum=float(center_momentum),
        loss_scale=float(1.0 / (B * n_terms)),
        inv_bvg=float(1.0 / (B * Vg)),
        warmup_teacher_temp=float(warmup_teacher_temp),
        teacher_temp=float(teacher_temp),
        inv_warmup_steps=float(1.0 / warmup_teacher_temp_steps),
        has_local=has_local)

    in_specs = [pl.BlockSpec(memory_space=pltpu.MemorySpace.SMEM),   # step
                pl.BlockSpec(memory_space=pltpu.MemorySpace.VMEM),   # teacher
                pl.BlockSpec(memory_space=pltpu.MemorySpace.VMEM)]   # student g
    args = [step, t_vbd, sg_vbd]
    if has_local:
        in_specs.append(pl.BlockSpec(memory_space=pltpu.MemorySpace.VMEM))
        args.append(jnp.transpose(student_local, (1, 0, 2)))         # (Vl,B,D)
    in_specs.append(pl.BlockSpec(memory_space=pltpu.MemorySpace.VMEM))  # center
    args.append(center)
    center_arg_idx = len(args) - 1

    loss, new_center = pl.pallas_call(
        kernel,
        out_shape=(jax.ShapeDtypeStruct((1,), jnp.float32),          # loss
                   jax.ShapeDtypeStruct(center.shape, center.dtype)),  # center
        in_specs=in_specs,
        out_specs=(pl.BlockSpec(memory_space=pltpu.MemorySpace.SMEM),
                   pl.BlockSpec(memory_space=pltpu.MemorySpace.VMEM)),
        input_output_aliases={center_arg_idx: 1},
    )(*args)

    return loss[0], new_center, step + 1


# ----------------------------------------------------------------------------
# Pure-JAX reference (mirrors the PyTorch code) for verification
# ----------------------------------------------------------------------------
def reference_loss(student_global, teacher_global, student_local, center, step,
                   *, student_temp, warmup_teacher_temp, teacher_temp,
                   warmup_teacher_temp_steps, center_momentum):
    c = center.reshape(-1)
    step_f = step[0].astype(jnp.float32)
    frac = jnp.minimum(step_f / float(warmup_teacher_temp_steps), 1.0)
    t_temp = warmup_teacher_temp + (teacher_temp - warmup_teacher_temp) * frac

    def crops(student, teacher, ignore_same_index):
        s = student / student_temp
        q = jax.nn.softmax((teacher - c[None, None, :]) / t_temp, axis=-1)
        logp = jax.nn.log_softmax(s, axis=-1)
        total = jnp.float32(0.0)
        n = 0
        for iq in range(teacher.shape[1]):
            for v in range(student.shape[1]):
                if ignore_same_index and v == iq:
                    continue
                l = jnp.mean(jnp.sum(-q[:, iq, :] * logp[:, v, :], axis=-1))
                total = total + l
                n += 1
        return total, n

    l_gg, n_gg = crops(student_global, teacher_global, True)
    l_lg, n_lg = (jnp.float32(0.0), 0)
    if student_local is not None:
        l_lg, n_lg = crops(student_local, teacher_global, False)
    total_loss = (l_gg + l_lg) / (n_gg + n_lg)

    batch_center = jnp.mean(teacher_global, axis=(0, 1))
    new_center = c * center_momentum + batch_center * (1 - center_momentum)
    return total_loss, new_center.reshape(center.shape), step + 1


# ----------------------------------------------------------------------------
if __name__ == "__main__":
    key = jax.random.PRNGKey(0)
    B, Vg, Vl, D = 8, 2, 4, 128   # bsz, global views, local views, input_size

    k1, k2, k3 = jax.random.split(key, 3)
    student_global = jax.random.normal(k1, (B, Vg, D), jnp.float32)
    teacher_global = jax.random.normal(k2, (B, Vg, D), jnp.float32)
    student_local = jax.random.normal(k3, (B, Vl, D), jnp.float32)

    # buffers from __init__ (deterministic, in-script)
    center = jnp.zeros((1, D), jnp.float32)
    step = jnp.zeros((1,), jnp.int32)

    cfg = dict(
        student_temp=0.1,
        warmup_teacher_temp=0.04,
        teacher_temp=0.07,
        warmup_teacher_temp_steps=10,
        center_momentum=0.9,
    )

    fwd = jax.jit(partial(dino_distillation_loss, **cfg))

    # --- with local views -----------------------------------------------
    loss, new_center, new_step = fwd(student_global, teacher_global,
                                     student_local, center, step)
    jax.block_until_ready((loss, new_center, new_step))
    ref_loss, ref_center, ref_step = reference_loss(
        student_global, teacher_global, student_local, center, step, **cfg)

    assert np.allclose(np.asarray(loss), np.asarray(ref_loss),
                       rtol=1e-4, atol=1e-5), (loss, ref_loss)
    assert np.allclose(np.asarray(new_center), np.asarray(ref_center),
                       rtol=1e-5, atol=1e-6)
    assert int(new_step[0]) == int(ref_step[0]) == 1

    # --- without local views (optional-input path) -----------------------
    loss2, new_center2, _ = fwd(student_global, teacher_global, None,
                                center, step)
    jax.block_until_ready((loss2, new_center2))
    ref_loss2, ref_center2, _ = reference_loss(
        student_global, teacher_global, None, center, step, **cfg)
    assert np.allclose(np.asarray(loss2), np.asarray(ref_loss2),
                       rtol=1e-4, atol=1e-5), (loss2, ref_loss2)
    assert np.allclose(np.asarray(new_center2), np.asarray(ref_center2),
                       rtol=1e-5, atol=1e-6)

    print("KERNEL_OK")
</pallas_src>

<mosaic_0001>
module attributes {stable_mosaic.version = 11 : i64} {
  func.func @kernel(%arg0: memref<1xi32, #tpu.memory_space<smem>>, %arg1: memref<2x8x128xf32, #tpu.memory_space<vmem>>, %arg2: memref<2x8x128xf32, #tpu.memory_space<vmem>>, %arg3: memref<4x8x128xf32, #tpu.memory_space<vmem>>, %arg4: memref<1x128xf32, #tpu.memory_space<vmem>>, %arg5: memref<1xf32, #tpu.memory_space<smem>>, %arg6: memref<1x128xf32, #tpu.memory_space<vmem>>) attributes {dimension_semantics = [], scalar_prefetch = 0 : i64, scratch_operands = 0 : i64, tpu.core_type = #tpu.core_type<tc>} {
    %c0 = arith.constant 0 : index
    %0 = memref.load %arg0[%c0] : memref<1xi32, #tpu.memory_space<smem>>
    %1 = arith.sitofp %0 : i32 to f32
    %cst = arith.constant 1.000000e-01 : f32
    %2 = arith.mulf %1, %cst : f32
    %cst_0 = arith.constant 1.000000e+00 : f32
    %3 = arith.minimumf %2, %cst_0 : f32
    %cst_1 = arith.constant 3.000000e-02 : f32
    %4 = arith.mulf %cst_1, %3 : f32
    %cst_2 = arith.constant 4.000000e-02 : f32
    %5 = arith.addf %cst_2, %4 : f32
    %cst_3 = arith.constant 1.000000e+00 : f32
    %6 = arith.divf %cst_3, %5 : f32
    %c0_4 = arith.constant 0 : index
    %c0_5 = arith.constant 0 : index
    %c0_6 = arith.constant 0 : index
    %7 = vector.load %arg1[%c0_4, %c0_5, %c0_6] : memref<2x8x128xf32, #tpu.memory_space<vmem>>, vector<2x8x128xf32>
    %c0_7 = arith.constant 0 : index
    %c0_8 = arith.constant 0 : index
    %8 = vector.load %arg4[%c0_7, %c0_8] : memref<1x128xf32, #tpu.memory_space<vmem>>, vector<1x128xf32>
    %9 = vector.shape_cast %8 : vector<1x128xf32> to vector<1x1x128xf32>
    %10 = vector.broadcast %9 : vector<1x1x128xf32> to vector<2x8x128xf32>
    %11 = arith.subf %7, %10 : vector<2x8x128xf32>
    %12 = vector.broadcast %6 : f32 to vector<2x8x128xf32>
    %13 = arith.mulf %11, %12 : vector<2x8x128xf32>
    %cst_9 = arith.constant dense<0xFF800000> : vector<2x8xf32>
    %14 = vector.multi_reduction <maximumf>, %13, %cst_9 [2] : vector<2x8x128xf32> to vector<2x8xf32>
    %15 = vector.shape_cast %14 : vector<2x8xf32> to vector<2x8x1xf32>
    %16 = vector.broadcast %15 : vector<2x8x1xf32> to vector<2x8x128xf32>
    %17 = arith.subf %13, %16 : vector<2x8x128xf32>
    %18 = math.exp %17 : vector<2x8x128xf32>
    %cst_10 = arith.constant dense<0.000000e+00> : vector<2x8xf32>
    %19 = vector.multi_reduction <add>, %18, %cst_10 [2] : vector<2x8x128xf32> to vector<2x8xf32>
    %20 = vector.shape_cast %19 : vector<2x8xf32> to vector<2x8x1xf32>
    %21 = tpu.reciprocal %20 : vector<2x8x1xf32> -> vector<2x8x1xf32>
    %22 = vector.broadcast %21 : vector<2x8x1xf32> to vector<2x8x128xf32>
    %23 = arith.mulf %18, %22 : vector<2x8x128xf32>
    %c0_11 = arith.constant 0 : index
    %c0_12 = arith.constant 0 : index
    %c0_13 = arith.constant 0 : index
    %24 = vector.load %arg2[%c0_11, %c0_12, %c0_13] : memref<2x8x128xf32, #tpu.memory_space<vmem>>, vector<2x8x128xf32>
    %cst_14 = arith.constant 1.000000e+01 : f32
    %25 = vector.broadcast %cst_14 : f32 to vector<2x8x128xf32>
    %26 = arith.mulf %24, %25 : vector<2x8x128xf32>
    %cst_15 = arith.constant dense<0xFF800000> : vector<2x8xf32>
    %27 = vector.multi_reduction <maximumf>, %26, %cst_15 [2] : vector<2x8x128xf32> to vector<2x8xf32>
    %28 = vector.shape_cast %27 : vector<2x8xf32> to vector<2x8x1xf32>
    %29 = vector.broadcast %28 : vector<2x8x1xf32> to vector<2x8x128xf32>
    %30 = arith.subf %26, %29 : vector<2x8x128xf32>
    %31 = math.exp %30 : vector<2x8x128xf32>
    %cst_16 = arith.constant dense<0.000000e+00> : vector<2x8xf32>
    %32 = vector.multi_reduction <add>, %31, %cst_16 [2] : vector<2x8x128xf32> to vector<2x8xf32>
    %33 = vector.shape_cast %32 : vector<2x8xf32> to vector<2x8x1xf32>
    %34 = math.log %33 : vector<2x8x1xf32>
    %35 = vector.broadcast %34 : vector<2x8x1xf32> to vector<2x8x128xf32>
    %36 = arith.subf %35, %30 : vector<2x8x128xf32>
    %cst_17 = arith.constant dense<0.000000e+00> : vector<8x128xf32>
    %37 = vector.multi_reduction <add>, %23, %cst_17 [0] : vector<2x8x128xf32> to vector<8x128xf32>
    %cst_18 = arith.constant dense<0.000000e+00> : vector<8x128xf32>
    %38 = vector.multi_reduction <add>, %36, %cst_18 [0] : vector<2x8x128xf32> to vector<8x128xf32>
    %39 = arith.mulf %37, %38 : vector<8x128xf32>
    %40 = arith.mulf %23, %36 : vector<2x8x128xf32>
    %cst_19 = arith.constant dense<0.000000e+00> : vector<8x128xf32>
    %41 = vector.multi_reduction <add>, %40, %cst_19 [0] : vector<2x8x128xf32> to vector<8x128xf32>
    %42 = arith.subf %39, %41 : vector<8x128xf32>
    %c0_20 = arith.constant 0 : index
    %c0_21 = arith.constant 0 : index
    %c0_22 = arith.constant 0 : index
    %43 = vector.load %arg3[%c0_20, %c0_21, %c0_22] : memref<4x8x128xf32, #tpu.memory_space<vmem>>, vector<4x8x128xf32>
    %cst_23 = arith.constant 1.000000e+01 : f32
    %44 = vector.broadcast %cst_23 : f32 to vector<4x8x128xf32>
    %45 = arith.mulf %43, %44 : vector<4x8x128xf32>
    %cst_24 = arith.constant dense<0xFF800000> : vector<4x8xf32>
    %46 = vector.multi_reduction <maximumf>, %45, %cst_24 [2] : vector<4x8x128xf32> to vector<4x8xf32>
    %47 = vector.shape_cast %46 : vector<4x8xf32> to vector<4x8x1xf32>
    %48 = vector.broadcast %47 : vector<4x8x1xf32> to vector<4x8x128xf32>
    %49 = arith.subf %45, %48 : vector<4x8x128xf32>
    %50 = math.exp %49 : vector<4x8x128xf32>
    %cst_25 = arith.constant dense<0.000000e+00> : vector<4x8xf32>
    %51 = vector.multi_reduction <add>, %50, %cst_25 [2] : vector<4x8x128xf32> to vector<4x8xf32>
    %52 = vector.shape_cast %51 : vector<4x8xf32> to vector<4x8x1xf32>
    %53 = math.log %52 : vector<4x8x1xf32>
    %54 = vector.broadcast %53 : vector<4x8x1xf32> to vector<4x8x128xf32>
    %55 = arith.subf %54, %49 : vector<4x8x128xf32>
    %cst_26 = arith.constant dense<0.000000e+00> : vector<8x128xf32>
    %56 = vector.multi_reduction <add>, %55, %cst_26 [0] : vector<4x8x128xf32> to vector<8x128xf32>
    %57 = arith.mulf %37, %56 : vector<8x128xf32>
    %58 = arith.addf %42, %57 : vector<8x128xf32>
    %59 = vector.shape_cast %58 : vector<8x128xf32> to vector<1x8x128xf32>
    %cst_27 = arith.constant dense<0.000000e+00> : vector<1xf32>
    %60 = vector.multi_reduction <add>, %59, %cst_27 [1, 2] : vector<1x8x128xf32> to vector<1xf32>
    %61 = vector.shape_cast %60 : vector<1xf32> to vector<1x1x1xf32>
    %62 = vector.extract %61[0, 0, 0] : f32 from vector<1x1x1xf32>
    %cst_28 = arith.constant 1.250000e-02 : f32
    %63 = arith.mulf %62, %cst_28 : f32
    %c0_29 = arith.constant 0 : index
    %64 = memref.load %arg5[%c0_29] : memref<1xf32, #tpu.memory_space<smem>>
    memref.store %63, %arg5[%c0_29] : memref<1xf32, #tpu.memory_space<smem>>
    %cst_30 = arith.constant dense<0.000000e+00> : vector<8x128xf32>
    %65 = vector.multi_reduction <add>, %7, %cst_30 [0] : vector<2x8x128xf32> to vector<8x128xf32>
    %cst_31 = arith.constant dense<0.000000e+00> : vector<128xf32>
    %66 = vector.multi_reduction <add>, %65, %cst_31 [0] : vector<8x128xf32> to vector<128xf32>
    %67 = vector.shape_cast %66 : vector<128xf32> to vector<1x128xf32>
    %cst_32 = arith.constant 6.250000e-02 : f32
    %68 = vector.broadcast %cst_32 : f32 to vector<1x128xf32>
    %69 = arith.mulf %67, %68 : vector<1x128xf32>
    %cst_33 = arith.constant 0.899999976 : f32
    %70 = vector.broadcast %cst_33 : f32 to vector<1x128xf32>
    %71 = arith.mulf %8, %70 : vector<1x128xf32>
    %cst_34 = arith.constant 1.000000e-01 : f32
    %72 = vector.broadcast %cst_34 : f32 to vector<1x128xf32>
    %73 = arith.mulf %69, %72 : vector<1x128xf32>
    %74 = arith.addf %71, %73 : vector<1x128xf32>
    %c0_35 = arith.constant 0 : index
    %c0_36 = arith.constant 0 : index
    %75 = vector.load %arg6[%c0_35, %c0_36] : memref<1x128xf32, #tpu.memory_space<vmem>>, vector<1x128xf32>
    tpu.vector_store %arg6[%c0_35, %c0_36], %74 {strides = array<i32>} : memref<1x128xf32, #tpu.memory_space<vmem>>, vector<1x128xf32>,
    return
  }
}

</mosaic_0001>

<llo_original>
// kernel: dino_distillation_loss.1
$region0: #{dino_distillation_loss.1}
  #allocation0 [shape = 'u32[]', space=smem, size = 0x4, offset = 0x4, fixed_abs, tag = 'smem constant byte address 0x4 - core index']
  #allocation1 [shape = 'u32[72,128]{1,0:T(1,128)}', space=vmem, size = 0x9000, scoped, tag = 'internal scratch']
  #allocation2 [shape = 's32[1]{0:T(128)S(6)}', space=smem, size = 0x200, scoped, tag = 'scoped memory for dino_distillation_loss.1']
  %s0 = inlined_call_operand.<no memory space> [shape: s32[1], index: 0, kind: input, shape index: {}]
  %s1 = inlined_call_operand.vmem [shape: f32[2,8,128], index: 1, kind: input, shape index: {}]
  %s2 = inlined_call_operand.vmem [shape: f32[2,8,128], index: 2, kind: input, shape index: {}]
  %s3 = inlined_call_operand.vmem [shape: f32[4,8,128], index: 3, kind: input, shape index: {}]
  %s4 = inlined_call_operand.vmem [shape: f32[1,128], index: 4, kind: input, shape index: {}, may-alias: {4,6}]
  %s5 = inlined_call_operand.hbm [shape: f32[1], index: 5, kind: output, shape index: {0}]
  %s6 = inlined_call_operand.vmem [shape: f32[1,128], index: 6, kind: output, shape index: {1}, may-alias: {4,6}]
  %7 = xla_tuple %s5, %s6
  %s8 = sld [smem:[#allocation0]]
  $region38: #{dino_distillation_loss.1} parent=0
    _
  %s10 = ssub.s32 1, %s8
  %s11 = scalar_select 0, %s10, %s8
  %12 = sst [smem:[#allocation2]] %s0
  $region1: #{dino_distillation_loss.1} parent=0
    #allocation3 [shape = 'u8[512]{0}', space=smem, size = 0x200, scoped, tag = 'output window, operand 0, single buffered']
    #allocation4 [shape = 's32[1]{0}', space=sflag, size = 0x4, scoped, tag = 'scoped memory for dino_distillation_loss.1']
    %13 = vsyncpa [#allocation4], 0
    // Predicated region
    $region2: #{dino_distillation_loss.1} parent=1 // pred_check
      _
    $region3: #{dino_distillation_loss.1} parent=1 // pred_check_branch
      %15 = sbr.rel (0) target = $region5
    $region4: #{dino_distillation_loss.1} parent=1 // pred_region
      _
    $region5: #{dino_distillation_loss.1} parent=1 // pred_fallthru
      _
    // Predicated region
    $region6: #{dino_distillation_loss.1} parent=1 // pred_check
      _
    $region7: #{dino_distillation_loss.1} parent=1 // pred_check_branch
      %17 = sbr.rel (0) target = $region9
    $region8: #{dino_distillation_loss.1} parent=1 // pred_region
      _
    $region9: #{dino_distillation_loss.1} parent=1 // pred_fallthru
      _
    // Predicated region
    $region10: #{dino_distillation_loss.1} parent=1 // pred_check
      _
    $region11: #{dino_distillation_loss.1} parent=1 // pred_check_branch
      %19 = sbr.rel (0) target = $region13
    $region12: #{dino_distillation_loss.1} parent=1 // pred_region
      _
    $region13: #{dino_distillation_loss.1} parent=1 // pred_fallthru
      _
    // Predicated region
    $region14: #{dino_distillation_loss.1} parent=1 // pred_check
      _
    $region15: #{dino_distillation_loss.1} parent=1 // pred_check_branch
      %21 = sbr.rel (0) target = $region17
    $region16: #{dino_distillation_loss.1} parent=1 // pred_region
      _
    $region17: #{dino_distillation_loss.1} parent=1 // pred_fallthru
      _
    // Predicated region
    $region18: #{dino_distillation_loss.1} parent=1 // pred_check
      _
    $region19: #{dino_distillation_loss.1} parent=1 // pred_check_branch
      %23 = sbr.rel (0) target = $region21
    $region20: #{dino_distillation_loss.1} parent=1 // pred_region
      _
    $region21: #{dino_distillation_loss.1} parent=1 // pred_fallthru
      _
    %s24 = sld [smem:[#allocation2]]
    %s25 = scvt.s32.f32 %s24
    %s26 = smul.f32 %s25, 0.1
    %s27 = smin.f32 %s26, 1.0
    %s28 = smul.f32 %s27, 0.03
    %s29 = sadd.f32 %s28, 0.04
    %v30 = vstv %s29
    %v31 = vrcp.pop %v30
    %v32 = vmul.f32 %v30, %v31
    %v33 = vsub.f32 1.0, %v32
    %v34 = vmul.f32 %v31, %v33
    %v35 = vadd.f32 %v31, %v34
    %vm36 = vweird.f32 %v30
    %vm37 = vweird.f32 %v31
    %vm38 = vmor %vm36, %vm37
    %v39 = vsel %vm38, %v31, %v35
    %v40 = vand.u32 2147483647, %v30
    %vm41 = vcmp.eq.f32.partialorder %v40, 8.507059e+37
    %v42 = vand.u32 %v30, 2147483648
    %v43 = vor.u32 1.1754944e-38, %v42
    %v44 = vsel %vm41, %v43, %v39
    %s45 = vtos %v44
    %v46 = vld [vmem:[%s1] sm:$0xff]
    %v47 = vld [vmem:[%s1 + $0x8] sm:$0xff]
    %v48 = vld [vmem:[%s4] sm:$0x1]
    %v50 = vperm.slane %v48, 0
    %v52 = vsub.f32 %v46, %v50
    %v53 = vsub.f32 %v47, %v50
    %v54 = vstv %s45
    %v55 = vmul.f32 %v52, %v54
    %v56 = vmul.f32 %v53, %v54
    %57 = vmax.xlane.f32.xlu0 %v55
    %v58 = vpop.xlane.xlu0 %57
    %59 = vmax.xlane.f32.xlu0 %v56
    %v60 = vpop.xlane.xlu0 %59
    %v61 = vsub.f32 %v55, %v58
    %v62 = vsub.f32 %v56, %v60
    %v63 = vmul.f32 %v61, 1.442695
    %v64 = vpow.pop %v63
    %v65 = vmul.f32 %v62, 1.442695
    %v66 = vpow.pop %v65
    %67 = vadd.xlane.f32.xlu0 %v64
    %v68 = vpop.xlane.xlu0 %67
    %69 = vadd.xlane.f32.xlu0 %v66
    %v70 = vpop.xlane.xlu0 %69
    %v71 = vrcp.pop %v68
    %v72 = vmul.f32 %v68, %v71
    %v73 = vsub.f32 1.0, %v72
    %v74 = vmul.f32 %v71, %v73
    %v75 = vadd.f32 %v71, %v74
    %vm76 = vweird.f32 %v68
    %vm77 = vweird.f32 %v71
    %vm78 = vmor %vm76, %vm77
    %v79 = vsel %vm78, %v71, %v75
    %v80 = vand.u32 2147483647, %v68
    %vm81 = vcmp.eq.f32.partialorder %v80, 8.507059e+37
    %v82 = vand.u32 %v68, 2147483648
    %v83 = vor.u32 1.1754944e-38, %v82
    %v84 = vsel %vm81, %v83, %v79
    %v85 = vrcp.pop %v70
    %v86 = vmul.f32 %v70, %v85
    %v87 = vsub.f32 1.0, %v86
    %v88 = vmul.f32 %v85, %v87
    %v89 = vadd.f32 %v85, %v88
    %vm90 = vweird.f32 %v70
    %vm91 = vweird.f32 %v85
    %vm92 = vmor %vm90, %vm91
    %v93 = vsel %vm92, %v85, %v89
    %v94 = vand.u32 2147483647, %v70
    %vm95 = vcmp.eq.f32.partialorder %v94, 8.507059e+37
    %v96 = vand.u32 %v70, 2147483648
    %v97 = vor.u32 1.1754944e-38, %v96
    %v98 = vsel %vm95, %v97, %v93
    %v99 = vmul.f32 %v64, %v84
    %v100 = vmul.f32 %v66, %v98
    %v101 = vld [vmem:[%s2] sm:$0xff]
    %v102 = vld [vmem:[%s2 + $0x8] sm:$0xff]
    %v103 = vmul.f32 %v101, 10.0
    %v104 = vmul.f32 %v102, 10.0
    %105 = vmax.xlane.f32.xlu0 %v103
    %v106 = vpop.xlane.xlu0 %105
    %107 = vmax.xlane.f32.xlu0 %v104
    %v108 = vpop.xlane.xlu0 %107
    %v109 = vsub.f32 %v103, %v106
    %v110 = vsub.f32 %v104, %v108
    %v111 = vmul.f32 %v109, 1.442695
    %v112 = vpow.pop %v111
    %v113 = vmul.f32 %v110, 1.442695
    %v114 = vpow.pop %v113
    %115 = vadd.xlane.f32.xlu0 %v112
    %v116 = vpop.xlane.xlu0 %115
    %117 = vadd.xlane.f32.xlu0 %v114
    %v118 = vpop.xlane.xlu0 %117
    %v119 = vlog2.pop %v116
    %v120 = vmul.f32 %v119, 0.6931472
    %v121 = vlog2.pop %v118
    %v122 = vmul.f32 %v121, 0.6931472
    %v123 = vsub.f32 %v120, %v109
    %v124 = vsub.f32 %v122, %v110
    %v125 = vadd.f32 %v99, %v100
    %v126 = vadd.f32 %v123, %v124
    %v127 = vmul.f32 %v125, %v126
    %v128 = vmul.f32 %v99, %v123
    %v129 = vmul.f32 %v100, %v124
    %v130 = vadd.f32 %v128, %v129
    %v131 = vsub.f32 %v127, %v130
    %v132 = vld [vmem:[%s3] sm:$0xff]
    %v133 = vld [vmem:[%s3 + $0x8] sm:$0xff]
    %v134 = vld [vmem:[%s3 + $0x10] sm:$0xff]
    %v135 = vld [vmem:[%s3 + $0x18] sm:$0xff]
    %v136 = vmul.f32 %v132, 10.0
    %v137 = vmul.f32 %v133, 10.0
    %v138 = vmul.f32 %v134, 10.0
    %v139 = vmul.f32 %v135, 10.0
    %140 = vmax.xlane.f32.xlu0 %v136
    %v141 = vpop.xlane.xlu0 %140
    %142 = vmax.xlane.f32.xlu0 %v137
    %v143 = vpop.xlane.xlu0 %142
    %144 = vmax.xlane.f32.xlu0 %v138
    %v145 = vpop.xlane.xlu0 %144
    %146 = vmax.xlane.f32.xlu0 %v139
    %v147 = vpop.xlane.xlu0 %146
    %v148 = vsub.f32 %v136, %v141
    %v149 = vsub.f32 %v137, %v143
    %v150 = vsub.f32 %v138, %v145
    %v151 = vsub.f32 %v139, %v147
    %v152 = vmul.f32 %v148, 1.442695
    %v153 = vpow.pop %v152
    %v154 = vmul.f32 %v149, 1.442695
    %v155 = vpow.pop %v154
    %v156 = vmul.f32 %v150, 1.442695
    %v157 = vpow.pop %v156
    %v158 = vmul.f32 %v151, 1.442695
    %v159 = vpow.pop %v158
    %160 = vadd.xlane.f32.xlu0 %v153
    %v161 = vpop.xlane.xlu0 %160
    %162 = vadd.xlane.f32.xlu0 %v155
    %v163 = vpop.xlane.xlu0 %162
    %164 = vadd.xlane.f32.xlu0 %v157
    %v165 = vpop.xlane.xlu0 %164
    %166 = vadd.xlane.f32.xlu0 %v159
    %v167 = vpop.xlane.xlu0 %166
    %v168 = vlog2.pop %v161
    %v169 = vmul.f32 %v168, 0.6931472
    %v170 = vlog2.pop %v163
    %v171 = vmul.f32 %v170, 0.6931472
    %v172 = vlog2.pop %v165
    %v173 = vmul.f32 %v172, 0.6931472
    %v174 = vlog2.pop %v167
    %v175 = vmul.f32 %v174, 0.6931472
    %v176 = vsub.f32 %v169, %v148
    %v177 = vsub.f32 %v171, %v149
    %v178 = vsub.f32 %v173, %v150
    %v179 = vsub.f32 %v175, %v151
    %v180 = vadd.f32 %v176, %v177
    %v181 = vadd.f32 %v180, %v178
    %v182 = vadd.f32 %v181, %v179
    %v183 = vmul.f32 %v125, %v182
    %v184 = vadd.f32 %v131, %v183
    %185 = vadd.xlane.f32.xlu0 %v184
    %v186 = vpop.xlane.xlu0 %185
    %v187 = vrot.slane %v186, 4
    %v188 = vadd.f32 %v186, %v187
    %v189 = vrot.slane %v188, 2
    %v190 = vadd.f32 %v188, %v189
    %v191 = vrot.slane %v190, 1
    %v192 = vadd.f32 %v190, %v191
    %s193 = vtos %v192
    %s194 = smul.f32 %s193, 0.0125
    %s195 = scalar_lea.smem [#allocation3], 0
    %196 = sst [smem:[%s195]] %s194
    %v197 = vadd.f32 %v46, %v47
    %v198 = vrot.slane %v197, 4
    %v199 = vadd.f32 %v197, %v198
    %v200 = vrot.slane %v199, 2
    %v201 = vadd.f32 %v199, %v200
    %v202 = vrot.slane %v201, 1
    %v203 = vadd.f32 %v201, %v202
    %v204 = vmul.f32 %v203, 0.0625
    %v205 = vmul.f32 %v48, 0.9
    %v206 = vmul.f32 %v204, 0.1
    %v207 = vadd.f32 %v205, %v206
    %208 = vst [vmem:[%s6] sm:$0x1] %v207
    // Predicated region
    $region22: #{dino_distillation_loss.1} parent=1 // pred_check
      _
    $region23: #{dino_distillation_loss.1} parent=1 // pred_check_branch
      %210 = sbr.rel (0) target = $region25
    $region24: #{dino_distillation_loss.1} parent=1 // pred_region
      %212 = vsyncadd [#allocation4], 0
      %s214 = sshll.u32 %s5, 4
      %s215 = int_to_ptr.hbm [resolvable:$true] %s214
      %217 = dma.smem_to_hbm [#allocation3], 16, %s215, [#allocation4]
    $region25: #{dino_distillation_loss.1} parent=1 // pred_fallthru
      _
    // Predicated region
    $region26: #{dino_distillation_loss.1} parent=1 // pred_check
      _
    $region27: #{dino_distillation_loss.1} parent=1 // pred_check_branch
      %219 = sbr.rel (0) target = $region29
    $region28: #{dino_distillation_loss.1} parent=1 // pred_region
      _
    $region29: #{dino_distillation_loss.1} parent=1 // pred_fallthru
      _
    // Predicated region
    $region30: #{dino_distillation_loss.1} parent=1 // pred_check
      _
    $region31: #{dino_distillation_loss.1} parent=1 // pred_check_branch
      %221 = sbr.rel (0) target = $region33
    $region32: #{dino_distillation_loss.1} parent=1 // pred_region
      %223 = dma.done [#allocation4], 16
    $region33: #{dino_distillation_loss.1} parent=1 // pred_fallthru
      _
    // Predicated region
    $region34: #{dino_distillation_loss.1} parent=1 // pred_check
      _
    $region35: #{dino_distillation_loss.1} parent=1 // pred_check_branch
      %225 = sbr.rel (0) target = $region37
    $region36: #{dino_distillation_loss.1} parent=1 // pred_region
      _
    $region37: #{dino_distillation_loss.1} parent=1 // pred_fallthru
      _
    %226 = sfence
    %227 = vsyncpa [#allocation4], 1

</llo_original>
